<compile_context>
chip_gen: v7x
topology: tpu7x:2x2x1
jax: 0.10.0
libtpu: 0.0.40
codegen_flags: <defaults>
</compile_context>

<pallas_src>
import jax
import jax.numpy as jnp
from jax.experimental import pallas as pl
from jax.experimental.pallas import tpu as pltpu


def mlp_kernel(x_ref, w1_ref, b1_ref, w2_ref, b2_ref,
               w3_ref, b3_ref, w4_ref, b4_ref, o_ref):
    # Fully fused 4-layer MLP on one batch tile. Activations are
    # [features, TILE_B]; weights are [out, in] bf16; biases [out, 1] f32.
    x = x_ref[...]                                                   # [5, TB] bf16

    h1 = jnp.dot(w1_ref[...], x, preferred_element_type=jnp.float32) + b1_ref[...]
    h1 = jnp.maximum(h1, 0.0)                                        # [32, TB] f32
    # Dropout(0.1): identity at inference time.

    h2 = jnp.dot(w2_ref[...], h1.astype(w2_ref.dtype),
                 preferred_element_type=jnp.float32) + b2_ref[...]
    h2 = jnp.maximum(h2, 0.0)                                        # [64, TB] f32
    # Dropout(0.1): identity at inference time.

    h3 = jnp.dot(w3_ref[...], h2.astype(w3_ref.dtype),
                 preferred_element_type=jnp.float32) + b3_ref[...]
    h3 = jnp.maximum(h3, 0.0)                                        # [32, TB] f32

    out = jnp.dot(w4_ref[...], h3.astype(w4_ref.dtype),
                  preferred_element_type=jnp.float32) + b4_ref[...]
    o_ref[...] = out.astype(o_ref.dtype)                             # [2, TB] f32


def _round_up(x, m):
    return (x + m - 1) // m * m


def neural_net_forward(x, params, *, tile_b_max=4096):
    """x: [B, 5] float32 -> [B, 2] float32 (eval-mode forward pass)."""
    (w1, b1), (w2, b2), (w3, b3), (w4, b4) = params
    B = x.shape[0]

    # Cast matmul operands to bf16 (MXU-native on v5e/v6e/v7x); biases stay f32.
    w1, w2, w3, w4 = (w.astype(jnp.bfloat16) for w in (w1, w2, w3, w4))
    b1, b2, b3, b4 = (b.astype(jnp.float32) for b in (b1, b2, b3, b4))

    # Feature-major layout with batch on the lane axis; pad B to a tile multiple.
    b_pad = _round_up(max(B, 1), 128)
    tile_b = min(tile_b_max, b_pad)
    b_pad = _round_up(b_pad, tile_b)

    x_fm = jnp.pad(x.astype(jnp.bfloat16).T, ((0, 0), (0, b_pad - B)))  # [5, b_pad]

    def batch_spec(feat):
        return pl.BlockSpec((feat, tile_b), lambda i: (0, i))

    def resident_spec(arr):
        # Same (whole) block every grid step -> DMA'd into VMEM once, stays resident.
        return pl.BlockSpec(arr.shape, lambda i: (0, 0))

    param_args = (w1, b1, w2, b2, w3, b3, w4, b4)

    out_fm = pl.pallas_call(
        mlp_kernel,
        out_shape=jax.ShapeDtypeStruct((2, b_pad), jnp.float32),
        grid=(b_pad // tile_b,),
        in_specs=[batch_spec(5)] + [resident_spec(a) for a in param_args],
        out_specs=batch_spec(2),
        compiler_params=pltpu.CompilerParams(
            dimension_semantics=("parallel",),
            vmem_limit_bytes=64 << 20),
    )(x_fm, *param_args)

    return out_fm[:, :B].T


def init_params(key):
    """Deterministic synthetic init. Weights [out, in] (PyTorch layout), biases [out, 1]."""
    dims = [(5, 32), (32, 64), (64, 32), (32, 2)]
    params = []
    for i, (fan_in, fan_out) in enumerate(dims):
        kw, kb = jax.random.split(jax.random.fold_in(key, i))
        bound = 1.0 / jnp.sqrt(fan_in)  # same scale as nn.Linear default init
        w = jax.random.uniform(kw, (fan_out, fan_in), jnp.float32, -bound, bound)
        b = jax.random.uniform(kb, (fan_out, 1), jnp.float32, -bound, bound)
        params.append((w, b))
    return params


def reference_forward(x, params):
    """Plain-JAX reference mirroring the kernel's bf16-in / f32-accumulate math."""
    h = x.astype(jnp.bfloat16)
    for i, (w, b) in enumerate(params):
        h = jnp.dot(h, w.astype(jnp.bfloat16).T,
                    preferred_element_type=jnp.float32) + b.T
        if i < 3:
            h = jnp.maximum(h, 0.0).astype(jnp.bfloat16)
    return h


if __name__ == "__main__":
    key = jax.random.PRNGKey(0)
    kx, kp, kx2 = jax.random.split(key, 3)

    params = init_params(kp)

    # Small demo batch (single grid step).
    B = 8
    x = jax.random.normal(kx, (B, 5), dtype=jnp.float32)
    out = jax.block_until_ready(neural_net_forward(x, params))
    ref = reference_forward(x, params)
    assert out.shape == (B, 2)
    assert jnp.allclose(out, ref, atol=1e-3, rtol=1e-3)

    # Exercise multi-tile grid + ragged-batch padding path.
    B2 = 300
    x2 = jax.random.normal(kx2, (B2, 5), dtype=jnp.float32)
    out2 = jax.block_until_ready(neural_net_forward(x2, params, tile_b_max=128))
    ref2 = reference_forward(x2, params)
    assert out2.shape == (B2, 2)
    assert jnp.allclose(out2, ref2, atol=1e-3, rtol=1e-3)

    print("KERNEL_OK")
</pallas_src>

<mosaic_0001>
module attributes {stable_mosaic.version = 11 : i64} {
  func.func @mlp_kernel(%arg0: i32, %arg1: memref<5x128xbf16, #tpu.memory_space<vmem>>, %arg2: memref<32x5xbf16, #tpu.memory_space<vmem>>, %arg3: memref<32x1xf32, #tpu.memory_space<vmem>>, %arg4: memref<64x32xbf16, #tpu.memory_space<vmem>>, %arg5: memref<64x1xf32, #tpu.memory_space<vmem>>, %arg6: memref<32x64xbf16, #tpu.memory_space<vmem>>, %arg7: memref<32x1xf32, #tpu.memory_space<vmem>>, %arg8: memref<2x32xbf16, #tpu.memory_space<vmem>>, %arg9: memref<2x1xf32, #tpu.memory_space<vmem>>, %arg10: memref<2x128xf32, #tpu.memory_space<vmem>>) attributes {dimension_semantics = [#tpu.dimension_semantics<parallel>], iteration_bounds = array<i64: 1>, scalar_prefetch = 0 : i64, scratch_operands = 0 : i64, tpu.core_type = #tpu.core_type<tc>, window_params = [{transform_indices = @transform_0, window_bounds = array<i64: 5, 128>}, {pipeline_mode = #tpu.pipeline_mode<synchronous>, transform_indices = @transform_1, window_bounds = array<i64: 32, 5>}, {pipeline_mode = #tpu.pipeline_mode<synchronous>, transform_indices = @transform_2, window_bounds = array<i64: 32, 1>}, {pipeline_mode = #tpu.pipeline_mode<synchronous>, transform_indices = @transform_3, window_bounds = array<i64: 64, 32>}, {pipeline_mode = #tpu.pipeline_mode<synchronous>, transform_indices = @transform_4, window_bounds = array<i64: 64, 1>}, {pipeline_mode = #tpu.pipeline_mode<synchronous>, transform_indices = @transform_5, window_bounds = array<i64: 32, 64>}, {pipeline_mode = #tpu.pipeline_mode<synchronous>, transform_indices = @transform_6, window_bounds = array<i64: 32, 1>}, {pipeline_mode = #tpu.pipeline_mode<synchronous>, transform_indices = @transform_7, window_bounds = array<i64: 2, 32>}, {pipeline_mode = #tpu.pipeline_mode<synchronous>, transform_indices = @transform_8, window_bounds = array<i64: 2, 1>}, {transform_indices = @transform_9, window_bounds = array<i64: 2, 128>}]} {
    %c0 = arith.constant 0 : index
    %c0_0 = arith.constant 0 : index
    %0 = vector.load %arg1[%c0, %c0_0] : memref<5x128xbf16, #tpu.memory_space<vmem>>, vector<5x128xbf16>
    %c0_1 = arith.constant 0 : index
    %c0_2 = arith.constant 0 : index
    %1 = vector.load %arg2[%c0_1, %c0_2] : memref<32x5xbf16, #tpu.memory_space<vmem>>, vector<32x5xbf16>
    %cst = arith.constant dense<0.000000e+00> : vector<32x128xf32>
    %2 = tpu.matmul %1, %0, %cst {dimension_numbers = #tpu.dot_dimension_numbers<[1], [0], [0], [1], [0, 0, 1, 1], [], []>} : vector<32x5xbf16>, vector<5x128xbf16>, vector<32x128xf32> -> vector<32x128xf32>
    %c0_3 = arith.constant 0 : index
    %c0_4 = arith.constant 0 : index
    %3 = vector.load %arg3[%c0_3, %c0_4] : memref<32x1xf32, #tpu.memory_space<vmem>>, vector<32x1xf32>
    %4 = vector.broadcast %3 : vector<32x1xf32> to vector<32x128xf32>
    %5 = arith.addf %2, %4 : vector<32x128xf32>
    %cst_5 = arith.constant 0.000000e+00 : f32
    %6 = vector.broadcast %cst_5 : f32 to vector<32x128xf32>
    %7 = arith.maximumf %5, %6 : vector<32x128xf32>
    %c0_6 = arith.constant 0 : index
    %c0_7 = arith.constant 0 : index
    %8 = vector.load %arg4[%c0_6, %c0_7] : memref<64x32xbf16, #tpu.memory_space<vmem>>, vector<64x32xbf16>
    %9 = arith.truncf %7 : vector<32x128xf32> to vector<32x128xbf16>
    %cst_8 = arith.constant dense<0.000000e+00> : vector<64x128xf32>
    %10 = tpu.matmul %8, %9, %cst_8 {dimension_numbers = #tpu.dot_dimension_numbers<[1], [0], [0], [1], [0, 0, 1, 1], [], []>} : vector<64x32xbf16>, vector<32x128xbf16>, vector<64x128xf32> -> vector<64x128xf32>
    %c0_9 = arith.constant 0 : index
    %c0_10 = arith.constant 0 : index
    %11 = vector.load %arg5[%c0_9, %c0_10] : memref<64x1xf32, #tpu.memory_space<vmem>>, vector<64x1xf32>
    %12 = vector.broadcast %11 : vector<64x1xf32> to vector<64x128xf32>
    %13 = arith.addf %10, %12 : vector<64x128xf32>
    %cst_11 = arith.constant 0.000000e+00 : f32
    %14 = vector.broadcast %cst_11 : f32 to vector<64x128xf32>
    %15 = arith.maximumf %13, %14 : vector<64x128xf32>
    %c0_12 = arith.constant 0 : index
    %c0_13 = arith.constant 0 : index
    %16 = vector.load %arg6[%c0_12, %c0_13] : memref<32x64xbf16, #tpu.memory_space<vmem>>, vector<32x64xbf16>
    %17 = arith.truncf %15 : vector<64x128xf32> to vector<64x128xbf16>
    %cst_14 = arith.constant dense<0.000000e+00> : vector<32x128xf32>
    %18 = tpu.matmul %16, %17, %cst_14 {dimension_numbers = #tpu.dot_dimension_numbers<[1], [0], [0], [1], [0, 0, 1, 1], [], []>} : vector<32x64xbf16>, vector<64x128xbf16>, vector<32x128xf32> -> vector<32x128xf32>
    %c0_15 = arith.constant 0 : index
    %c0_16 = arith.constant 0 : index
    %19 = vector.load %arg7[%c0_15, %c0_16] : memref<32x1xf32, #tpu.memory_space<vmem>>, vector<32x1xf32>
    %20 = vector.broadcast %19 : vector<32x1xf32> to vector<32x128xf32>
    %21 = arith.addf %18, %20 : vector<32x128xf32>
    %cst_17 = arith.constant 0.000000e+00 : f32
    %22 = vector.broadcast %cst_17 : f32 to vector<32x128xf32>
    %23 = arith.maximumf %21, %22 : vector<32x128xf32>
    %c0_18 = arith.constant 0 : index
    %c0_19 = arith.constant 0 : index
    %24 = vector.load %arg8[%c0_18, %c0_19] : memref<2x32xbf16, #tpu.memory_space<vmem>>, vector<2x32xbf16>
    %25 = arith.truncf %23 : vector<32x128xf32> to vector<32x128xbf16>
    %cst_20 = arith.constant dense<0.000000e+00> : vector<2x128xf32>
    %26 = tpu.matmul %24, %25, %cst_20 {dimension_numbers = #tpu.dot_dimension_numbers<[1], [0], [0], [1], [0, 0, 1, 1], [], []>} : vector<2x32xbf16>, vector<32x128xbf16>, vector<2x128xf32> -> vector<2x128xf32>
    %c0_21 = arith.constant 0 : index
    %c0_22 = arith.constant 0 : index
    %27 = vector.load %arg9[%c0_21, %c0_22] : memref<2x1xf32, #tpu.memory_space<vmem>>, vector<2x1xf32>
    %28 = vector.broadcast %27 : vector<2x1xf32> to vector<2x128xf32>
    %29 = arith.addf %26, %28 : vector<2x128xf32>
    %c0_23 = arith.constant 0 : index
    %c0_24 = arith.constant 0 : index
    %30 = vector.load %arg10[%c0_23, %c0_24] : memref<2x128xf32, #tpu.memory_space<vmem>>, vector<2x128xf32>
    tpu.vector_store %arg10[%c0_23, %c0_24], %29 {strides = array<i32>} : memref<2x128xf32, #tpu.memory_space<vmem>>, vector<2x128xf32>,
    return
  }
  func.func @transform_0(%arg0: i32) -> (i32, i32) {
    %c0_i32 = arith.constant 0 : i32
    %c0_i32_0 = arith.constant 0 : i32
    return %c0_i32, %arg0 : i32, i32
  }
  func.func @transform_1(%arg0: i32) -> (i32, i32) {
    %c0_i32 = arith.constant 0 : i32
    %c0_i32_0 = arith.constant 0 : i32
    %c0_i32_1 = arith.constant 0 : i32
    return %c0_i32, %c0_i32_0 : i32, i32
  }
  func.func @transform_2(%arg0: i32) -> (i32, i32) {
    %c0_i32 = arith.constant 0 : i32
    %c0_i32_0 = arith.constant 0 : i32
    %c0_i32_1 = arith.constant 0 : i32
    return %c0_i32, %c0_i32_0 : i32, i32
  }
  func.func @transform_3(%arg0: i32) -> (i32, i32) {
    %c0_i32 = arith.constant 0 : i32
    %c0_i32_0 = arith.constant 0 : i32
    %c0_i32_1 = arith.constant 0 : i32
    return %c0_i32, %c0_i32_0 : i32, i32
  }
  func.func @transform_4(%arg0: i32) -> (i32, i32) {
    %c0_i32 = arith.constant 0 : i32
    %c0_i32_0 = arith.constant 0 : i32
    %c0_i32_1 = arith.constant 0 : i32
    return %c0_i32, %c0_i32_0 : i32, i32
  }
  func.func @transform_5(%arg0: i32) -> (i32, i32) {
    %c0_i32 = arith.constant 0 : i32
    %c0_i32_0 = arith.constant 0 : i32
    %c0_i32_1 = arith.constant 0 : i32
    return %c0_i32, %c0_i32_0 : i32, i32
  }
  func.func @transform_6(%arg0: i32) -> (i32, i32) {
    %c0_i32 = arith.constant 0 : i32
    %c0_i32_0 = arith.constant 0 : i32
    %c0_i32_1 = arith.constant 0 : i32
    return %c0_i32, %c0_i32_0 : i32, i32
  }
  func.func @transform_7(%arg0: i32) -> (i32, i32) {
    %c0_i32 = arith.constant 0 : i32
    %c0_i32_0 = arith.constant 0 : i32
    %c0_i32_1 = arith.constant 0 : i32
    return %c0_i32, %c0_i32_0 : i32, i32
  }
  func.func @transform_8(%arg0: i32) -> (i32, i32) {
    %c0_i32 = arith.constant 0 : i32
    %c0_i32_0 = arith.constant 0 : i32
    %c0_i32_1 = arith.constant 0 : i32
    return %c0_i32, %c0_i32_0 : i32, i32
  }
  func.func @transform_9(%arg0: i32) -> (i32, i32) {
    %c0_i32 = arith.constant 0 : i32
    %c0_i32_0 = arith.constant 0 : i32
    return %c0_i32, %arg0 : i32, i32
  }
}

</mosaic_0001>

<llo_original>
// kernel: tpu_custom_call.1
$region0: #{tpu_custom_call.1}
  #allocation0 [shape = 'u32[]', space=smem, size = 0x4, offset = 0x4, fixed_abs, tag = 'smem constant byte address 0x4 - core index']
  #allocation1 [shape = 'u32[144,128]{1,0:T(1,128)}', space=vmem, size = 0x12000, scoped, tag = 'internal scratch']
  %s0 = inlined_call_operand.hbm [shape: bf16[5,128], index: 0, kind: input, shape index: {}]
  %s1 = inlined_call_operand.hbm [shape: bf16[32,5], index: 1, kind: input, shape index: {}]
  %s2 = inlined_call_operand.hbm [shape: f32[32,1], index: 2, kind: input, shape index: {}]
  %s3 = inlined_call_operand.hbm [shape: bf16[64,32], index: 3, kind: input, shape index: {}]
  %s4 = inlined_call_operand.hbm [shape: f32[64,1], index: 4, kind: input, shape index: {}]
  %s5 = inlined_call_operand.hbm [shape: bf16[32,64], index: 5, kind: input, shape index: {}]
  %s6 = inlined_call_operand.hbm [shape: f32[32,1], index: 6, kind: input, shape index: {}]
  %s7 = inlined_call_operand.hbm [shape: bf16[2,32], index: 7, kind: input, shape index: {}]
  %s8 = inlined_call_operand.hbm [shape: f32[2,1], index: 8, kind: input, shape index: {}]
  %s9 = inlined_call_operand.hbm [shape: f32[2,128], index: 9, kind: output, shape index: {}]
  %s10 = sld [smem:[#allocation0]]
  $region82: #{tpu_custom_call.1} parent=0
    _
  %s12 = ssub.s32 1, %s10
  %s13 = scalar_select 0, %s12, %s10
  $region1: #{tpu_custom_call.1} parent=0
    #allocation2 [shape = 'u8[2048]{0}', space=vmem, size = 0x800, scoped, tag = 'input window, operand 0, single buffered']
    #allocation3 [shape = 's32[1]{0}', space=sflag, size = 0x4, scoped, tag = 'scoped memory for tpu_custom_call.1']
    #allocation4 [shape = 's32[1]{0}', space=sflag, size = 0x4, scoped, tag = 'scoped memory for tpu_custom_call.1']
    #allocation5 [shape = 'u8[8192]{0}', space=vmem, size = 0x2000, scoped, tag = 'input window, operand 1, single buffered']
    #allocation6 [shape = 's32[1]{0}', space=sflag, size = 0x4, scoped, tag = 'scoped memory for tpu_custom_call.1']
    #allocation7 [shape = 'u8[16384]{0}', space=vmem, size = 0x4000, scoped, tag = 'input window, operand 2, single buffered']
    #allocation8 [shape = 'u8[16384]{0}', space=vmem, size = 0x4000, scoped, tag = 'input window, operand 3, single buffered']
    #allocation9 [shape = 's32[1]{0}', space=sflag, size = 0x4, scoped, tag = 'scoped memory for tpu_custom_call.1']
    #allocation10 [shape = 'u8[32768]{0}', space=vmem, size = 0x8000, scoped, tag = 'input window, operand 4, single buffered']
    #allocation11 [shape = 'u8[8192]{0}', space=vmem, size = 0x2000, scoped, tag = 'input window, operand 5, single buffered']
    #allocation12 [shape = 's32[1]{0}', space=sflag, size = 0x4, scoped, tag = 'scoped memory for tpu_custom_call.1']
    #allocation13 [shape = 'u8[16384]{0}', space=vmem, size = 0x4000, scoped, tag = 'input window, operand 6, single buffered']
    #allocation14 [shape = 'u8[512]{0}', space=vmem, size = 0x400, scoped, tag = 'input window, operand 7, single buffered']
    #allocation15 [shape = 's32[1]{0}', space=sflag, size = 0x4, scoped, tag = 'scoped memory for tpu_custom_call.1']
    #allocation16 [shape = 'u8[1024]{0}', space=vmem, size = 0x400, scoped, tag = 'input window, operand 8, single buffered']
    #allocation17 [shape = 'u8[1024]{0}', space=vmem, size = 0x400, scoped, tag = 'output window, operand 0, single buffered']
    %14 = vsyncpa [#allocation3], 0
    %15 = vsyncpa [#allocation6], 0
    %16 = vsyncpa [#allocation9], 0
    %17 = vsyncpa [#allocation12], 0
    %18 = vsyncpa [#allocation15], 0
    %19 = vsyncpa [#allocation4], 0
    // Predicated region
    $region2: #{tpu_custom_call.1} parent=1 // pred_check
      _
    $region3: #{tpu_custom_call.1} parent=1 // pred_check_branch
      %21 = sbr.rel (0) target = $region5
    $region4: #{tpu_custom_call.1} parent=1 // pred_region
      %s23 = ssub.s32 64, 64
      %24 = vsyncadd [#allocation3], %s23
      %s26 = sshll.u32 [#allocation2], 4
      %s27 = int_to_ptr.vmem [resolvable:$true] %s26
      %29 = dma.hbm_to_vmem [thread:$0]  %s0, 64, %s27, [#allocation3]
    $region5: #{tpu_custom_call.1} parent=1 // pred_fallthru
      _
    // Predicated region
    $region6: #{tpu_custom_call.1} parent=1 // pred_check
      _
    $region7: #{tpu_custom_call.1} parent=1 // pred_check_branch
      %31 = sbr.rel (0) target = $region9
    $region8: #{tpu_custom_call.1} parent=1 // pred_region
      %s33 = ssub.s32 256, 256
      %34 = vsyncadd [#allocation6], %s33
      %s35 = sshll.u32 [#allocation5], 4
      %s36 = int_to_ptr.vmem [resolvable:$true] %s35
      %41 = dma.hbm_to_vmem [thread:$0]  %s1, 256, %s36, [#allocation6], 64, 64, 4
    $region9: #{tpu_custom_call.1} parent=1 // pred_fallthru
      _
    // Predicated region
    $region10: #{tpu_custom_call.1} parent=1 // pred_check
      _
    $region11: #{tpu_custom_call.1} parent=1 // pred_check_branch
      %43 = sbr.rel (0) target = $region13
    $region12: #{tpu_custom_call.1} parent=1 // pred_region
      %s45 = ssub.s32 512, 512
      %46 = vsyncadd [#allocation6], %s45
      %s47 = sshll.u32 [#allocation7], 4
      %s48 = int_to_ptr.vmem [resolvable:$true] %s47
      %53 = dma.hbm_to_vmem [thread:$0]  %s2, 512, %s48, [#allocation6], 128, 128, 8
    $region13: #{tpu_custom_call.1} parent=1 // pred_fallthru
      _
    // Predicated region
    $region14: #{tpu_custom_call.1} parent=1 // pred_check
      _
    $region15: #{tpu_custom_call.1} parent=1 // pred_check_branch
      %55 = sbr.rel (0) target = $region17
    $region16: #{tpu_custom_call.1} parent=1 // pred_region
      %s57 = ssub.s32 512, 512
      %58 = vsyncadd [#allocation9], %s57
      %s59 = sshll.u32 [#allocation8], 4
      %s60 = int_to_ptr.vmem [resolvable:$true] %s59
      %65 = dma.hbm_to_vmem [thread:$0]  %s3, 512, %s60, [#allocation9], 64, 64, 4
    $region17: #{tpu_custom_call.1} parent=1 // pred_fallthru
      _
    // Predicated region
    $region18: #{tpu_custom_call.1} parent=1 // pred_check
      _
    $region19: #{tpu_custom_call.1} parent=1 // pred_check_branch
      %67 = sbr.rel (0) target = $region21
    $region20: #{tpu_custom_call.1} parent=1 // pred_region
      %s69 = ssub.s32 1024, 1024
      %70 = vsyncadd [#allocation9], %s69
      %s71 = sshll.u32 [#allocation10], 4
      %s72 = int_to_ptr.vmem [resolvable:$true] %s71
      %77 = dma.hbm_to_vmem [thread:$0]  %s4, 1024, %s72, [#allocation9], 128, 128, 8
    $region21: #{tpu_custom_call.1} parent=1 // pred_fallthru
      _
    // Predicated region
    $region22: #{tpu_custom_call.1} parent=1 // pred_check
      _
    $region23: #{tpu_custom_call.1} parent=1 // pred_check_branch
      %79 = sbr.rel (0) target = $region25
    $region24: #{tpu_custom_call.1} parent=1 // pred_region
      %s81 = ssub.s32 256, 256
      %82 = vsyncadd [#allocation12], %s81
      %s83 = sshll.u32 [#allocation11], 4
      %s84 = int_to_ptr.vmem [resolvable:$true] %s83
      %89 = dma.hbm_to_vmem [thread:$0]  %s5, 256, %s84, [#allocation12], 64, 64, 4
    $region25: #{tpu_custom_call.1} parent=1 // pred_fallthru
      _
    // Predicated region
    $region26: #{tpu_custom_call.1} parent=1 // pred_check
      _
    $region27: #{tpu_custom_call.1} parent=1 // pred_check_branch
      %91 = sbr.rel (0) target = $region29
    $region28: #{tpu_custom_call.1} parent=1 // pred_region
      %s93 = ssub.s32 512, 512
      %94 = vsyncadd [#allocation12], %s93
      %s95 = sshll.u32 [#allocation13], 4
      %s96 = int_to_ptr.vmem [resolvable:$true] %s95
      %101 = dma.hbm_to_vmem [thread:$0]  %s6, 512, %s96, [#allocation12], 128, 128, 8
    $region29: #{tpu_custom_call.1} parent=1 // pred_fallthru
      _
    // Predicated region
    $region30: #{tpu_custom_call.1} parent=1 // pred_check
      _
    $region31: #{tpu_custom_call.1} parent=1 // pred_check_branch
      %103 = sbr.rel (0) target = $region33
    $region32: #{tpu_custom_call.1} parent=1 // pred_region
      %s105 = ssub.s32 16, 16
      %106 = vsyncadd [#allocation15], %s105
      %s108 = sshll.u32 [#allocation14], 4
      %s109 = int_to_ptr.vmem [resolvable:$true] %s108
      %111 = dma.hbm_to_vmem [thread:$0]  %s7, 16, %s109, [#allocation15]
    $region33: #{tpu_custom_call.1} parent=1 // pred_fallthru
      _
    // Predicated region
    $region34: #{tpu_custom_call.1} parent=1 // pred_check
      _
    $region35: #{tpu_custom_call.1} parent=1 // pred_check_branch
      %113 = sbr.rel (0) target = $region37
    $region36: #{tpu_custom_call.1} parent=1 // pred_region
      %s115 = ssub.s32 32, 32
      %116 = vsyncadd [#allocation15], %s115
      %s118 = sshll.u32 [#allocation16], 4
      %s119 = int_to_ptr.vmem [resolvable:$true] %s118
      %121 = dma.hbm_to_vmem [thread:$0]  %s8, 32, %s119, [#allocation15]
    $region37: #{tpu_custom_call.1} parent=1 // pred_fallthru
      _
    // Predicated region
    $region38: #{tpu_custom_call.1} parent=1 // pred_check
      _
    $region39: #{tpu_custom_call.1} parent=1 // pred_check_branch
      %123 = sbr.rel (0) target = $region41
    $region40: #{tpu_custom_call.1} parent=1 // pred_region
      %124 = dma.done [#allocation3], 64
    $region41: #{tpu_custom_call.1} parent=1 // pred_fallthru
      _
    // Predicated region
    $region42: #{tpu_custom_call.1} parent=1 // pred_check
      _
    $region43: #{tpu_custom_call.1} parent=1 // pred_check_branch
      %126 = sbr.rel (0) target = $region45
    $region44: #{tpu_custom_call.1} parent=1 // pred_region
      %127 = dma.done [#allocation6], 256
    $region45: #{tpu_custom_call.1} parent=1 // pred_fallthru
      _
    // Predicated region
    $region46: #{tpu_custom_call.1} parent=1 // pred_check
      _
    $region47: #{tpu_custom_call.1} parent=1 // pred_check_branch
      %129 = sbr.rel (0) target = $region49
    $region48: #{tpu_custom_call.1} parent=1 // pred_region
      %130 = dma.done [#allocation6], 512
    $region49: #{tpu_custom_call.1} parent=1 // pred_fallthru
      _
    // Predicated region
    $region50: #{tpu_custom_call.1} parent=1 // pred_check
      _
    $region51: #{tpu_custom_call.1} parent=1 // pred_check_branch
      %132 = sbr.rel (0) target = $region53
    $region52: #{tpu_custom_call.1} parent=1 // pred_region
      %133 = dma.done [#allocation9], 512
    $region53: #{tpu_custom_call.1} parent=1 // pred_fallthru
      _
    // Predicated region
    $region54: #{tpu_custom_call.1} parent=1 // pred_check
      _
    $region55: #{tpu_custom_call.1} parent=1 // pred_check_branch
      %135 = sbr.rel (0) target = $region57
    $region56: #{tpu_custom_call.1} parent=1 // pred_region
      %136 = dma.done [#allocation9], 1024
    $region57: #{tpu_custom_call.1} parent=1 // pred_fallthru
      _
    // Predicated region
    $region58: #{tpu_custom_call.1} parent=1 // pred_check
      _
    $region59: #{tpu_custom_call.1} parent=1 // pred_check_branch
      %138 = sbr.rel (0) target = $region61
    $region60: #{tpu_custom_call.1} parent=1 // pred_region
      %139 = dma.done [#allocation12], 256
    $region61: #{tpu_custom_call.1} parent=1 // pred_fallthru
      _
    // Predicated region
    $region62: #{tpu_custom_call.1} parent=1 // pred_check
      _
    $region63: #{tpu_custom_call.1} parent=1 // pred_check_branch
      %141 = sbr.rel (0) target = $region65
    $region64: #{tpu_custom_call.1} parent=1 // pred_region
      %142 = dma.done [#allocation12], 512
    $region65: #{tpu_custom_call.1} parent=1 // pred_fallthru
      _
    // Predicated region
    $region66: #{tpu_custom_call.1} parent=1 // pred_check
      _
    $region67: #{tpu_custom_call.1} parent=1 // pred_check_branch
      %144 = sbr.rel (0) target = $region69
    $region68: #{tpu_custom_call.1} parent=1 // pred_region
      %145 = dma.done [#allocation15], 16
    $region69: #{tpu_custom_call.1} parent=1 // pred_fallthru
      _
    // Predicated region
    $region70: #{tpu_custom_call.1} parent=1 // pred_check
      _
    $region71: #{tpu_custom_call.1} parent=1 // pred_check_branch
      %147 = sbr.rel (0) target = $region73
    $region72: #{tpu_custom_call.1} parent=1 // pred_region
      %148 = dma.done [#allocation15], 32
    $region73: #{tpu_custom_call.1} parent=1 // pred_fallthru
      _
    %v150 = vld [vmem:[#allocation2] sm:$0x7]
    %v151 = vld [vmem:[#allocation5] sm:$0xf]
    %v152 = vld [vmem:[#allocation5 + $0x4] sm:$0xf]
    %v153 = vld [vmem:[#allocation5 + $0x8] sm:$0xf]
    %v154 = vld [vmem:[#allocation5 + $0xc] sm:$0xf]
    %v155 = vld [vmem:[#allocation7] sm:$0xff]
    %v156 = vld [vmem:[#allocation7 + $0x8] sm:$0xff]
    %v157 = vld [vmem:[#allocation7 + $0x10] sm:$0xff]
    %v158 = vld [vmem:[#allocation7 + $0x18] sm:$0xff]
    %160 = vset.pattern.permute.xlu0 0
    %161 = vperm.xlu0 %160, %v155
    %v162 = vpop.permute.xlu0 %161
    %165 = vset.pattern.permute.xlu0 0
    %166 = vperm.xlu0 %165, %v156
    %v167 = vpop.permute.xlu0 %166
    %170 = vset.pattern.permute.xlu0 0
    %171 = vperm.xlu0 %170, %v157
    %v172 = vpop.permute.xlu0 %171
    %175 = vset.pattern.permute.xlu0 0
    %176 = vperm.xlu0 %175, %v158
    %v177 = vpop.permute.xlu0 %176
    %v183 = vunpack.c.l.b16 %v151
    %v184 = vunpack.c.l.b16 %v152
    %v185 = vunpack.c.l.b16 %v153
    %v186 = vunpack.c.l.b16 %v154
    %v187 = vpack.c.b16 %v184, %v183
    %v188 = vpack.c.b16 %v186, %v185
    %vm189 = vcmask 39936
    %v191 = vsel %vm189, %v187, 0
    %v194 = vsel %vm189, %v188, 0
    %vm196 = vcmask 1041408
    %vm197 = vcmask 1042432
    %v198 = vsel %vm196, 4294967295, 65535
    %v199 = vsel %vm197, %v198, 0
    %v201 = vand.u32 %v150, %v199
    %203 = vmatprep.subr.bf16.mxu0 0
    %204 = vmatpush1.bf16.msra.mxu0 %v201
    %205 = vmatprep.subr.bf16.mxu0 0
    %206 = vmatpush1.bf16.msra.mxu0 0
    %207 = vmatprep.subr.bf16.mxu0 0
    %208 = vmatpush1.bf16.msra.mxu0 0
    %209 = vmatprep.subr.bf16.mxu0 0
    %210 = vmatpush1.bf16.msra.mxu0 0
    %211 = vmatprep.subr.bf16.mxu0 0
    %212 = vmatpush1.bf16.msra.mxu0 0
    %213 = vmatprep.subr.bf16.mxu0 0
    %214 = vmatpush1.bf16.msra.mxu0 0
    %215 = vmatprep.subr.bf16.mxu0 0
    %216 = vmatpush1.bf16.msra.mxu0 0
    %217 = vmatprep.subr.bf16.mxu0 0
    %218 = vmatpush1.bf16.msra.mxu0 0
    %219 = vmatprep.subr.bf16.mxu0 0
    %220 = vmatpush1.bf16.msra.mxu0 0
    %221 = vmatprep.subr.bf16.mxu0 0
    %222 = vmatpush1.bf16.msra.mxu0 0
    %223 = vmatprep.subr.bf16.mxu0 0
    %224 = vmatpush1.bf16.msra.mxu0 0
    %225 = vmatprep.subr.bf16.mxu0 0
    %226 = vmatpush1.bf16.msra.mxu0 0
    %227 = vmatprep.subr.bf16.mxu0 0
    %228 = vmatpush1.bf16.msra.mxu0 0
    %229 = vmatprep.subr.bf16.mxu0 0
    %230 = vmatpush1.bf16.msra.mxu0 0
    %231 = vmatprep.subr.bf16.mxu0 0
    %232 = vmatpush1.bf16.msra.mxu0 0
    %233 = vmatprep.subr.bf16.mxu0 0
    %234 = vmatpush1.bf16.msra.mxu0 0
    %235 = vmatprep.mubr.bf16.mxu0 0
    %236 = vmatmul.mubr.bf16.gmra.mrb[0].mxu0 %v191
    %v237 = vpop.f32.mrb[0].mxu0
    %v238 = vadd.f32 %v162, %v237
    %v239 = vpop.f32.mrb[0].mxu0
    %v240 = vpop.f32.mrb[0].mxu0
    %v241 = vadd.f32 %v167, %v240
    %v242 = vpop.f32.mrb[0].mxu0
    %243 = vmatprep.mubr.bf16.mxu0 0
    %244 = vmatmul.mubr.bf16.gmra.mrb[0].mxu0 %v194
    %v245 = vpop.f32.mrb[0].mxu0
    %v246 = vadd.f32 %v172, %v245
    %v247 = vpop.f32.mrb[0].mxu0
    %v248 = vpop.f32.mrb[0].mxu0
    %v249 = vadd.f32 %v177, %v248
    %v250 = vpop.f32.mrb[0].mxu0
    %251 = vdwg.mxu0
    %v252 = vmax.f32 %v238, 0.0
    %v253 = vmax.f32 %v241, 0.0
    %v254 = vmax.f32 %v246, 0.0
    %v255 = vmax.f32 %v249, 0.0
    %v256 = vld [vmem:[#allocation8] sm:$0xf]
    %v257 = vld [vmem:[#allocation8 + $0x4] sm:$0xf]
    %v258 = vld [vmem:[#allocation8 + $0x8] sm:$0xf]
    %v259 = vld [vmem:[#allocation8 + $0xc] sm:$0xf]
    %v260 = vld [vmem:[#allocation8 + $0x10] sm:$0xf]
    %v261 = vld [vmem:[#allocation8 + $0x14] sm:$0xf]
    %v262 = vld [vmem:[#allocation8 + $0x18] sm:$0xf]
    %v263 = vld [vmem:[#allocation8 + $0x1c] sm:$0xf]
    %v264 = vpack.c.bf16 %v253, %v252
    %v265 = vpack.c.bf16 %v255, %v254
    %v266 = vld [vmem:[#allocation10] sm:$0xff]
    %v267 = vld [vmem:[#allocation10 + $0x8] sm:$0xff]
    %v268 = vld [vmem:[#allocation10 + $0x10] sm:$0xff]
    %v269 = vld [vmem:[#allocation10 + $0x18] sm:$0xff]
    %v270 = vld [vmem:[#allocation10 + $0x20] sm:$0xff]
    %v271 = vld [vmem:[#allocation10 + $0x28] sm:$0xff]
    %v272 = vld [vmem:[#allocation10 + $0x30] sm:$0xff]
    %v273 = vld [vmem:[#allocation10 + $0x38] sm:$0xff]
    %275 = vset.pattern.permute.xlu0 0
    %276 = vperm.xlu0 %275, %v266
    %v277 = vpop.permute.xlu0 %276
    %280 = vset.pattern.permute.xlu0 0
    %281 = vperm.xlu0 %280, %v267
    %v282 = vpop.permute.xlu0 %281
    %285 = vset.pattern.permute.xlu0 0
    %286 = vperm.xlu0 %285, %v268
    %v287 = vpop.permute.xlu0 %286
    %290 = vset.pattern.permute.xlu0 0
    %291 = vperm.xlu0 %290, %v269
    %v292 = vpop.permute.xlu0 %291
    %295 = vset.pattern.permute.xlu0 0
    %296 = vperm.xlu0 %295, %v270
    %v297 = vpop.permute.xlu0 %296
    %300 = vset.pattern.permute.xlu0 0
    %301 = vperm.xlu0 %300, %v271
    %v302 = vpop.permute.xlu0 %301
    %305 = vset.pattern.permute.xlu0 0
    %306 = vperm.xlu0 %305, %v272
    %v307 = vpop.permute.xlu0 %306
    %310 = vset.pattern.permute.xlu0 0
    %311 = vperm.xlu0 %310, %v273
    %v312 = vpop.permute.xlu0 %311
    %v322 = vunpack.c.l.b16 %v256
    %v323 = vunpack.c.l.b16 %v257
    %v324 = vunpack.c.l.b16 %v258
    %v325 = vunpack.c.l.b16 %v259
    %v326 = vunpack.c.l.b16 %v260
    %v327 = vunpack.c.l.b16 %v261
    %v328 = vunpack.c.l.b16 %v262
    %v329 = vunpack.c.l.b16 %v263
    %v330 = vpack.c.b16 %v323, %v322
    %v331 = vpack.c.b16 %v325, %v324
    %v332 = vpack.c.b16 %v327, %v326
    %v333 = vpack.c.b16 %v329, %v328
    %vm334 = vcmask 261120
    %v336 = vsel %vm334, %v330, 0
    %v339 = vsel %vm334, %v331, 0
    %v342 = vsel %vm334, %v332, 0
    %v345 = vsel %vm334, %v333, 0
    %347 = vmatprep.subr.bf16.mxu0 0
    %348 = vmatpush1.bf16.msra.mxu0 %v264
    %349 = vmatprep.subr.bf16.mxu0 0
    %350 = vmatpush1.bf16.msra.mxu0 %v265
    %351 = vmatprep.subr.bf16.mxu0 0
    %352 = vmatpush1.bf16.msra.mxu0 0
    %353 = vmatprep.subr.bf16.mxu0 0
    %354 = vmatpush1.bf16.msra.mxu0 0
    %355 = vmatprep.subr.bf16.mxu0 0
    %356 = vmatpush1.bf16.msra.mxu0 0
    %357 = vmatprep.subr.bf16.mxu0 0
    %358 = vmatpush1.bf16.msra.mxu0 0
    %359 = vmatprep.subr.bf16.mxu0 0
    %360 = vmatpush1.bf16.msra.mxu0 0
    %361 = vmatprep.subr.bf16.mxu0 0
    %362 = vmatpush1.bf16.msra.mxu0 0
    %363 = vmatprep.subr.bf16.mxu0 0
    %364 = vmatpush1.bf16.msra.mxu0 0
    %365 = vmatprep.subr.bf16.mxu0 0
    %366 = vmatpush1.bf16.msra.mxu0 0
    %367 = vmatprep.subr.bf16.mxu0 0
    %368 = vmatpush1.bf16.msra.mxu0 0
    %369 = vmatprep.subr.bf16.mxu0 0
    %370 = vmatpush1.bf16.msra.mxu0 0
    %371 = vmatprep.subr.bf16.mxu0 0
    %372 = vmatpush1.bf16.msra.mxu0 0
    %373 = vmatprep.subr.bf16.mxu0 0
    %374 = vmatpush1.bf16.msra.mxu0 0
    %375 = vmatprep.subr.bf16.mxu0 0
    %376 = vmatpush1.bf16.msra.mxu0 0
    %377 = vmatprep.subr.bf16.mxu0 0
    %378 = vmatpush1.bf16.msra.mxu0 0
    %379 = vmatprep.mubr.bf16.mxu0 0
    %380 = vmatmul.mubr.bf16.gmra.mrb[0].mxu0 %v336
    %v381 = vpop.f32.mrb[0].mxu0
    %v382 = vadd.f32 %v277, %v381
    %v383 = vpop.f32.mrb[0].mxu0
    %v384 = vpop.f32.mrb[0].mxu0
    %v385 = vadd.f32 %v282, %v384
    %v386 = vpop.f32.mrb[0].mxu0
    %387 = vmatprep.mubr.bf16.mxu0 0
    %388 = vmatmul.mubr.bf16.gmra.mrb[0].mxu0 %v339
    %v389 = vpop.f32.mrb[0].mxu0
    %v390 = vadd.f32 %v287, %v389
    %v391 = vpop.f32.mrb[0].mxu0
    %v392 = vpop.f32.mrb[0].mxu0
    %v393 = vadd.f32 %v292, %v392
    %v394 = vpop.f32.mrb[0].mxu0
    %395 = vmatprep.mubr.bf16.mxu0 0
    %396 = vmatmul.mubr.bf16.gmra.mrb[0].mxu0 %v342
    %v397 = vpop.f32.mrb[0].mxu0
    %v398 = vadd.f32 %v297, %v397
    %v399 = vpop.f32.mrb[0].mxu0
    %v400 = vpop.f32.mrb[0].mxu0
    %v401 = vadd.f32 %v302, %v400
    %v402 = vpop.f32.mrb[0].mxu0
    %403 = vmatprep.mubr.bf16.mxu0 0
    %404 = vmatmul.mubr.bf16.gmra.mrb[0].mxu0 %v345
    %v405 = vpop.f32.mrb[0].mxu0
    %v406 = vadd.f32 %v307, %v405
    %v407 = vpop.f32.mrb[0].mxu0
    %v408 = vpop.f32.mrb[0].mxu0
    %v409 = vadd.f32 %v312, %v408
    %v410 = vpop.f32.mrb[0].mxu0
    %411 = vdwg.mxu0
    %v412 = vmax.f32 %v382, 0.0
    %v413 = vmax.f32 %v385, 0.0
    %v414 = vmax.f32 %v390, 0.0
    %v415 = vmax.f32 %v393, 0.0
    %v416 = vmax.f32 %v398, 0.0
    %v417 = vmax.f32 %v401, 0.0
    %v418 = vmax.f32 %v406, 0.0
    %v419 = vmax.f32 %v409, 0.0
    %v420 = vld [vmem:[#allocation11] sm:$0xf]
    %v421 = vld [vmem:[#allocation11 + $0x4] sm:$0xf]
    %v422 = vld [vmem:[#allocation11 + $0x8] sm:$0xf]
    %v423 = vld [vmem:[#allocation11 + $0xc] sm:$0xf]
    %v424 = vpack.c.bf16 %v413, %v412
    %v425 = vpack.c.bf16 %v415, %v414
    %v426 = vpack.c.bf16 %v417, %v416
    %v427 = vpack.c.bf16 %v419, %v418
    %v428 = vld [vmem:[#allocation13] sm:$0xff]
    %v429 = vld [vmem:[#allocation13 + $0x8] sm:$0xff]
    %v430 = vld [vmem:[#allocation13 + $0x10] sm:$0xff]
    %v431 = vld [vmem:[#allocation13 + $0x18] sm:$0xff]
    %433 = vset.pattern.permute.xlu0 0
    %434 = vperm.xlu0 %433, %v428
    %v435 = vpop.permute.xlu0 %434
    %438 = vset.pattern.permute.xlu0 0
    %439 = vperm.xlu0 %438, %v429
    %v440 = vpop.permute.xlu0 %439
    %443 = vset.pattern.permute.xlu0 0
    %444 = vperm.xlu0 %443, %v430
    %v445 = vpop.permute.xlu0 %444
    %448 = vset.pattern.permute.xlu0 0
    %449 = vperm.xlu0 %448, %v431
    %v450 = vpop.permute.xlu0 %449
    %v456 = vunpack.c.l.b16 %v420
    %v457 = vunpack.c.l.b16 %v421
    %v458 = vunpack.c.l.b16 %v422
    %v459 = vunpack.c.l.b16 %v423
    %v460 = vpack.c.b16 %v457, %v456
    %v461 = vpack.c.b16 %v459, %v458
    %vm462 = vcmask 523264
    %v464 = vsel %vm462, %v460, 0
    %v467 = vsel %vm462, %v461, 0
    %469 = vmatprep.subr.bf16.mxu0 0
    %470 = vmatpush1.bf16.msra.mxu0 %v424
    %471 = vmatprep.subr.bf16.mxu0 0
    %472 = vmatpush1.bf16.msra.mxu0 %v425
    %473 = vmatprep.subr.bf16.mxu0 0
    %474 = vmatpush1.bf16.msra.mxu0 %v426
    %475 = vmatprep.subr.bf16.mxu0 0
    %476 = vmatpush1.bf16.msra.mxu0 %v427
    %477 = vmatprep.subr.bf16.mxu0 0
    %478 = vmatpush1.bf16.msra.mxu0 0
    %479 = vmatprep.subr.bf16.mxu0 0
    %480 = vmatpush1.bf16.msra.mxu0 0
    %481 = vmatprep.subr.bf16.mxu0 0
    %482 = vmatpush1.bf16.msra.mxu0 0
    %483 = vmatprep.subr.bf16.mxu0 0
    %484 = vmatpush1.bf16.msra.mxu0 0
    %485 = vmatprep.subr.bf16.mxu0 0
    %486 = vmatpush1.bf16.msra.mxu0 0
    %487 = vmatprep.subr.bf16.mxu0 0
    %488 = vmatpush1.bf16.msra.mxu0 0
    %489 = vmatprep.subr.bf16.mxu0 0
    %490 = vmatpush1.bf16.msra.mxu0 0
    %491 = vmatprep.subr.bf16.mxu0 0
    %492 = vmatpush1.bf16.msra.mxu0 0
    %493 = vmatprep.subr.bf16.mxu0 0
    %494 = vmatpush1.bf16.msra.mxu0 0
    %495 = vmatprep.subr.bf16.mxu0 0
    %496 = vmatpush1.bf16.msra.mxu0 0
    %497 = vmatprep.subr.bf16.mxu0 0
    %498 = vmatpush1.bf16.msra.mxu0 0
    %499 = vmatprep.subr.bf16.mxu0 0
    %500 = vmatpush1.bf16.msra.mxu0 0
    %501 = vmatprep.mubr.bf16.mxu0 0
    %502 = vmatmul.mubr.bf16.gmra.mrb[0].mxu0 %v464
    %v503 = vpop.f32.mrb[0].mxu0
    %v504 = vadd.f32 %v435, %v503
    %v505 = vpop.f32.mrb[0].mxu0
    %v506 = vpop.f32.mrb[0].mxu0
    %v507 = vadd.f32 %v440, %v506
    %v508 = vpop.f32.mrb[0].mxu0
    %509 = vmatprep.mubr.bf16.mxu0 0
    %510 = vmatmul.mubr.bf16.gmra.mrb[0].mxu0 %v467
    %v511 = vpop.f32.mrb[0].mxu0
    %v512 = vadd.f32 %v445, %v511
    %v513 = vpop.f32.mrb[0].mxu0
    %v514 = vpop.f32.mrb[0].mxu0
    %v515 = vadd.f32 %v450, %v514
    %v516 = vpop.f32.mrb[0].mxu0
    %517 = vdwg.mxu0
    %v518 = vmax.f32 %v504, 0.0
    %v519 = vmax.f32 %v507, 0.0
    %v520 = vmax.f32 %v512, 0.0
    %v521 = vmax.f32 %v515, 0.0
    %v522 = vld [vmem:[#allocation14] sm:$0x1]
    %v523 = vpack.c.bf16 %v519, %v518
    %v524 = vpack.c.bf16 %v521, %v520
    %v525 = vld [vmem:[#allocation16] sm:$0x3]
    %527 = vset.pattern.permute.xlu0 0
    %528 = vperm.xlu0 %527, %v525
    %v529 = vpop.permute.xlu0 %528
    %v532 = vsel %vm334, %v522, 0
    %534 = vmatprep.subr.bf16.mxu0 0
    %535 = vmatpush1.bf16.msra.mxu0 %v523
    %536 = vmatprep.subr.bf16.mxu0 0
    %537 = vmatpush1.bf16.msra.mxu0 %v524
    %538 = vmatprep.subr.bf16.mxu0 0
    %539 = vmatpush1.bf16.msra.mxu0 0
    %540 = vmatprep.subr.bf16.mxu0 0
    %541 = vmatpush1.bf16.msra.mxu0 0
    %542 = vmatprep.subr.bf16.mxu0 0
    %543 = vmatpush1.bf16.msra.mxu0 0
    %544 = vmatprep.subr.bf16.mxu0 0
    %545 = vmatpush1.bf16.msra.mxu0 0
    %546 = vmatprep.subr.bf16.mxu0 0
    %547 = vmatpush1.bf16.msra.mxu0 0
    %548 = vmatprep.subr.bf16.mxu0 0
    %549 = vmatpush1.bf16.msra.mxu0 0
    %550 = vmatprep.subr.bf16.mxu0 0
    %551 = vmatpush1.bf16.msra.mxu0 0
    %552 = vmatprep.subr.bf16.mxu0 0
    %553 = vmatpush1.bf16.msra.mxu0 0
    %554 = vmatprep.subr.bf16.mxu0 0
    %555 = vmatpush1.bf16.msra.mxu0 0
    %556 = vmatprep.subr.bf16.mxu0 0
    %557 = vmatpush1.bf16.msra.mxu0 0
    %558 = vmatprep.subr.bf16.mxu0 0
    %559 = vmatpush1.bf16.msra.mxu0 0
    %560 = vmatprep.subr.bf16.mxu0 0
    %561 = vmatpush1.bf16.msra.mxu0 0
    %562 = vmatprep.subr.bf16.mxu0 0
    %563 = vmatpush1.bf16.msra.mxu0 0
    %564 = vmatprep.subr.bf16.mxu0 0
    %565 = vmatpush1.bf16.msra.mxu0 0
    %566 = vmatprep.mubr.bf16.mxu0 0
    %567 = vmatmul.mubr.bf16.gmra.mrb[0].mxu0 %v532
    %v568 = vpop.f32.mrb[0].mxu0
    %v569 = vadd.f32 %v529, %v568
    %v570 = vpop.f32.mrb[0].mxu0
    %v571 = vpop.f32.mrb[0].mxu0
    %v572 = vpop.f32.mrb[0].mxu0
    %573 = vdwg.mxu0
    %574 = vst [vmem:[#allocation17] sm:$0x3] %v569
    // Predicated region
    $region74: #{tpu_custom_call.1} parent=1 // pred_check
      _
    $region75: #{tpu_custom_call.1} parent=1 // pred_check_branch
      %576 = sbr.rel (0) target = $region77
    $region76: #{tpu_custom_call.1} parent=1 // pred_region
      %s578 = ssub.s32 32, 32
      %579 = vsyncadd [#allocation4], %s578
      %s581 = sshll.u32 [#allocation17], 4
      %s582 = int_to_ptr.vmem [resolvable:$true] %s581
      %584 = dma.vmem_to_hbm [thread:$0]  %s582, 32, %s9, [#allocation4]
    $region77: #{tpu_custom_call.1} parent=1 // pred_fallthru
      _
    // Predicated region
    $region78: #{tpu_custom_call.1} parent=1 // pred_check
      _
    $region79: #{tpu_custom_call.1} parent=1 // pred_check_branch
      %586 = sbr.rel (0) target = $region81
    $region80: #{tpu_custom_call.1} parent=1 // pred_region
      %587 = dma.done [#allocation4], 32
    $region81: #{tpu_custom_call.1} parent=1 // pred_fallthru
      _
    %588 = vsyncpa [#allocation3], 1
    %589 = vsyncpa [#allocation6], 1
    %590 = vsyncpa [#allocation9], 1
    %591 = vsyncpa [#allocation12], 1
    %592 = vsyncpa [#allocation15], 1
    %593 = vsyncpa [#allocation4], 1

</llo_original>
